<compile_context>
chip_gen: v7x
topology: tpu7x:2x2x1
jax: 0.10.0
libtpu: 0.0.40
codegen_flags: <defaults>
</compile_context>

<pallas_src>
import functools

import jax
import jax.numpy as jnp
from jax.experimental import pallas as pl
from jax.experimental.pallas import tpu as pltpu


def _delay_kernel(shift_ref, x_ref, o_ref, *, channels_total, cb):
    # shift_ref: SMEM (nb*C,) int32 right-rotation amounts (flattened 1-D).
    # x_ref:     VMEM (B, cb, 2T) float32 -- channel-block slab, resident in
    #            VMEM across the whole inner branch loop.
    # o_ref:     VMEM (B, cb, 2T) float32 -- (branch j, channel block c) slab.
    c = pl.program_id(0)  # channel-block index (outer, "parallel")
    j = pl.program_id(1)  # branch index       (inner, "arbitrary")
    base = j * channels_total + c * cb
    # Static (unrolled) loop over channels in this block: one XLU lane
    # rotation per channel, amounts are dynamic scalars from SMEM.
    # TODO(synk): if delays within a branch were affine in the channel index,
    # this could be a single strided pltpu.roll(..., stride=..., stride_axis=1).
    for i in range(cb):
        s = shift_ref[base + i]
        o_ref[:, i, :] = pltpu.roll(x_ref[:, i, :], s, 1)


def _pick_channel_block(C, bytes_per_channel, budget_bytes):
    """Largest channel block that (a) divides C, (b) is a multiple of 8 or
    equals the full channel dim (TPU sublane rule), (c) keeps one block
    buffer under budget_bytes."""
    if C % 8 != 0:
        # Sublane rule forces the full dim when C is not a multiple of 8.
        return C
    cb = (budget_bytes // max(bytes_per_channel, 1)) // 8 * 8
    cb = max(8, min(cb, C))
    while C % cb != 0:
        cb -= 8
    return cb


def delay_forward(x_complex, delays, *, block_budget_bytes=2 * 1024 * 1024):
    """Pallas TPU forward: out[:, j, d, :] = roll(x[:, d, :], -delays[j][d]).

    x_complex: (B, C, T) complex64 -> (B, branch_num, C, T) complex64.
    `delays` must be static Python ints at trace time (the rotation table is
    built in Python); traced delay values are not supported.
    """
    B, C, T = x_complex.shape
    nb = len(delays)
    assert all(len(branch) == C for branch in delays), (
        "Number of channels of input signal must equal the number of delays "
        "in each branch of model."
    )
    T2 = 2 * T

    # complex -> interleaved float32 [re, im] on the time axis (one pass).
    x_f = jnp.stack([jnp.real(x_complex), jnp.imag(x_complex)], axis=-1)
    x_f = x_f.astype(jnp.float32).reshape(B, C, T2)

    # Left shift by `d` complex samples == right-rotate the interleaved axis
    # by (2T - 2*(d % T)) % 2T (np.roll / pltpu.roll convention, non-negative,
    # normalized to [0, 2T)).
    shifts_py = [(T2 - 2 * (int(d) % T)) % T2 for branch in delays for d in branch]
    assert all(s % 2 == 0 for s in shifts_py), (
        "rotation amounts must be even so real/imag lanes never mix"
    )
    shifts = jnp.asarray(shifts_py, dtype=jnp.int32)  # (nb*C,) 1-D, no SMEM padding

    cb = _pick_channel_block(C, B * T2 * 4, block_budget_bytes)
    n_cblocks = C // cb

    kernel = functools.partial(_delay_kernel, channels_total=C, cb=cb)
    bytes_accessed = (B * C * T2 + B * nb * C * T2) * 4  # pure data movement

    out_f = pl.pallas_call(
        kernel,
        out_shape=jax.ShapeDtypeStruct((B, nb, C, T2), jnp.float32),
        grid_spec=pltpu.PrefetchScalarGridSpec(
            num_scalar_prefetch=1,
            # Branch axis innermost so the input channel slab (index_map is
            # constant over it) stays resident in VMEM across all branches.
            grid=(n_cblocks, nb),
            in_specs=[
                pl.BlockSpec((B, cb, T2), lambda c, j, shifts_ref: (0, c, 0)),
            ],
            out_specs=pl.BlockSpec(
                (B, None, cb, T2), lambda c, j, shifts_ref: (0, j, c, 0)
            ),
        ),
        compiler_params=pltpu.CompilerParams(
            dimension_semantics=("parallel", "arbitrary"),
            # Blocks are capped at ~2 MiB each (double-buffered in+out fits
            # comfortably); 32 MiB is safe on v7x and below physical on all gens.
            vmem_limit_bytes=32 * 1024 * 1024,
        ),
        cost_estimate=pl.CostEstimate(
            flops=0, transcendentals=0, bytes_accessed=bytes_accessed
        ),
    )(shifts, x_f)

    # Interleaved float32 back to complex64, already in (B, nb, C, T) layout
    # (no transposes on either side).
    out_ri = out_f.reshape(B, nb, C, T, 2)
    return jax.lax.complex(out_ri[..., 0], out_ri[..., 1])


def delay_reference(x_complex, delays):
    """Pure-JAX reference mirroring the PyTorch forward."""
    outs = []
    for branch in delays:
        rows = [
            jnp.roll(x_complex[:, d, :], -int(delay), axis=-1)
            for d, delay in enumerate(branch)
        ]
        outs.append(jnp.stack(rows, axis=1))  # (B, C, T)
    return jnp.stack(outs, axis=1)            # (B, NB, C, T)


if __name__ == "__main__":
    # Small deterministic example: B=2, channels (delays_num) C=4, T=128
    # (so 2T=256 keeps the output lane-dense), branch_num=3.
    B, C, T = 2, 4, 128
    delays = [[0, 1, 2, 3], [1, 3, 5, 7], [2, 4, 8, 16]]

    key = jax.random.PRNGKey(0)
    kr, ki = jax.random.split(key)
    x_real = jax.random.normal(kr, (B, C, T), dtype=jnp.float32)
    x_imag = jax.random.normal(ki, (B, C, T), dtype=jnp.float32)
    x = (x_real + 1j * x_imag).astype(jnp.complex64)

    out = jax.block_until_ready(delay_forward(x, delays))

    ref = delay_reference(x, delays)
    assert out.shape == (B, len(delays), C, T)
    assert jnp.allclose(out, ref, atol=1e-6), "Pallas output mismatch vs reference"

    print("KERNEL_OK")
</pallas_src>

<mosaic_0001>
module attributes {stable_mosaic.version = 11 : i64} {
  func.func @_delay_kernel(%arg0: i32, %arg1: i32, %arg2: memref<12xi32, #tpu.memory_space<smem>>, %arg3: memref<2x4x256xf32, #tpu.memory_space<vmem>>, %arg4: memref<2x1x4x256xf32, #tpu.memory_space<vmem>>) attributes {dimension_semantics = [#tpu.dimension_semantics<parallel>, #tpu.dimension_semantics<arbitrary>], iteration_bounds = array<i64: 1, 3>, scalar_prefetch = 1 : i64, scratch_operands = 0 : i64, tpu.core_type = #tpu.core_type<tc>, window_params = [{transform_indices = @transform_0, window_bounds = array<i64: 2, 4, 256>}, {transform_indices = @transform_1, window_bounds = array<i64: 2, 1, 4, 256>}]} {
    %c4_i32 = arith.constant 4 : i32
    %0 = arith.muli %arg1, %c4_i32 : i32
    %c4_i32_0 = arith.constant 4 : i32
    %1 = arith.muli %arg0, %c4_i32_0 : i32
    %2 = arith.addi %0, %1 : i32
    %c0_i32 = arith.constant 0 : i32
    %3 = arith.addi %2, %c0_i32 : i32
    %4 = arith.index_cast %3 : i32 to index
    %5 = memref.load %arg2[%4] : memref<12xi32, #tpu.memory_space<smem>>
    %c0 = arith.constant 0 : index
    %c0_1 = arith.constant 0 : index
    %c0_2 = arith.constant 0 : index
    %6 = vector.load %arg3[%c0, %c0_1, %c0_2] : memref<2x4x256xf32, #tpu.memory_space<vmem>>, vector<2x1x256xf32>
    %7 = vector.shape_cast %6 : vector<2x1x256xf32> to vector<2x256xf32>
    %8 = tpu.dynamic_rotate %7 by %5 dim 1 : vector<2x256xf32>, i32 -> vector<2x256xf32>
    %c0_3 = arith.constant 0 : index
    %c0_4 = arith.constant 0 : index
    %c0_5 = arith.constant 0 : index
    %c0_6 = arith.constant 0 : index
    %9 = vector.load %arg4[%c0_3, %c0_4, %c0_5, %c0_6] : memref<2x1x4x256xf32, #tpu.memory_space<vmem>>, vector<2x1x1x256xf32>
    %10 = vector.shape_cast %9 : vector<2x1x1x256xf32> to vector<2x256xf32>
    %11 = vector.shape_cast %8 : vector<2x256xf32> to vector<2x1x1x256xf32>
    tpu.vector_store %arg4[%c0_3, %c0_4, %c0_5, %c0_6], %11 {strides = array<i32>} : memref<2x1x4x256xf32, #tpu.memory_space<vmem>>, vector<2x1x1x256xf32>,
    %c1_i32 = arith.constant 1 : i32
    %12 = arith.addi %2, %c1_i32 : i32
    %13 = arith.index_cast %12 : i32 to index
    %14 = memref.load %arg2[%13] : memref<12xi32, #tpu.memory_space<smem>>
    %c0_7 = arith.constant 0 : index
    %c1 = arith.constant 1 : index
    %c0_8 = arith.constant 0 : index
    %15 = vector.load %arg3[%c0_7, %c1, %c0_8] : memref<2x4x256xf32, #tpu.memory_space<vmem>>, vector<2x1x256xf32>
    %16 = vector.shape_cast %15 : vector<2x1x256xf32> to vector<2x256xf32>
    %17 = tpu.dynamic_rotate %16 by %14 dim 1 : vector<2x256xf32>, i32 -> vector<2x256xf32>
    %c0_9 = arith.constant 0 : index
    %c0_10 = arith.constant 0 : index
    %c1_11 = arith.constant 1 : index
    %c0_12 = arith.constant 0 : index
    %18 = vector.load %arg4[%c0_9, %c0_10, %c1_11, %c0_12] : memref<2x1x4x256xf32, #tpu.memory_space<vmem>>, vector<2x1x1x256xf32>
    %19 = vector.shape_cast %18 : vector<2x1x1x256xf32> to vector<2x256xf32>
    %20 = vector.shape_cast %17 : vector<2x256xf32> to vector<2x1x1x256xf32>
    tpu.vector_store %arg4[%c0_9, %c0_10, %c1_11, %c0_12], %20 {strides = array<i32>} : memref<2x1x4x256xf32, #tpu.memory_space<vmem>>, vector<2x1x1x256xf32>,
    %c2_i32 = arith.constant 2 : i32
    %21 = arith.addi %2, %c2_i32 : i32
    %22 = arith.index_cast %21 : i32 to index
    %23 = memref.load %arg2[%22] : memref<12xi32, #tpu.memory_space<smem>>
    %c0_13 = arith.constant 0 : index
    %c2 = arith.constant 2 : index
    %c0_14 = arith.constant 0 : index
    %24 = vector.load %arg3[%c0_13, %c2, %c0_14] : memref<2x4x256xf32, #tpu.memory_space<vmem>>, vector<2x1x256xf32>
    %25 = vector.shape_cast %24 : vector<2x1x256xf32> to vector<2x256xf32>
    %26 = tpu.dynamic_rotate %25 by %23 dim 1 : vector<2x256xf32>, i32 -> vector<2x256xf32>
    %c0_15 = arith.constant 0 : index
    %c0_16 = arith.constant 0 : index
    %c2_17 = arith.constant 2 : index
    %c0_18 = arith.constant 0 : index
    %27 = vector.load %arg4[%c0_15, %c0_16, %c2_17, %c0_18] : memref<2x1x4x256xf32, #tpu.memory_space<vmem>>, vector<2x1x1x256xf32>
    %28 = vector.shape_cast %27 : vector<2x1x1x256xf32> to vector<2x256xf32>
    %29 = vector.shape_cast %26 : vector<2x256xf32> to vector<2x1x1x256xf32>
    tpu.vector_store %arg4[%c0_15, %c0_16, %c2_17, %c0_18], %29 {strides = array<i32>} : memref<2x1x4x256xf32, #tpu.memory_space<vmem>>, vector<2x1x1x256xf32>,
    %c3_i32 = arith.constant 3 : i32
    %30 = arith.addi %2, %c3_i32 : i32
    %31 = arith.index_cast %30 : i32 to index
    %32 = memref.load %arg2[%31] : memref<12xi32, #tpu.memory_space<smem>>
    %c0_19 = arith.constant 0 : index
    %c3 = arith.constant 3 : index
    %c0_20 = arith.constant 0 : index
    %33 = vector.load %arg3[%c0_19, %c3, %c0_20] : memref<2x4x256xf32, #tpu.memory_space<vmem>>, vector<2x1x256xf32>
    %34 = vector.shape_cast %33 : vector<2x1x256xf32> to vector<2x256xf32>
    %35 = tpu.dynamic_rotate %34 by %32 dim 1 : vector<2x256xf32>, i32 -> vector<2x256xf32>
    %c0_21 = arith.constant 0 : index
    %c0_22 = arith.constant 0 : index
    %c3_23 = arith.constant 3 : index
    %c0_24 = arith.constant 0 : index
    %36 = vector.load %arg4[%c0_21, %c0_22, %c3_23, %c0_24] : memref<2x1x4x256xf32, #tpu.memory_space<vmem>>, vector<2x1x1x256xf32>
    %37 = vector.shape_cast %36 : vector<2x1x1x256xf32> to vector<2x256xf32>
    %38 = vector.shape_cast %35 : vector<2x256xf32> to vector<2x1x1x256xf32>
    tpu.vector_store %arg4[%c0_21, %c0_22, %c3_23, %c0_24], %38 {strides = array<i32>} : memref<2x1x4x256xf32, #tpu.memory_space<vmem>>, vector<2x1x1x256xf32>,
    return
  }
  func.func @transform_0(%arg0: i32, %arg1: i32, %arg2: memref<12xi32, #tpu.memory_space<smem>>) -> (i32, i32, i32) {
    %c0_i32 = arith.constant 0 : i32
    %c0_i32_0 = arith.constant 0 : i32
    %c0_i32_1 = arith.constant 0 : i32
    return %c0_i32, %arg0, %c0_i32_0 : i32, i32, i32
  }
  func.func @transform_1(%arg0: i32, %arg1: i32, %arg2: memref<12xi32, #tpu.memory_space<smem>>) -> (i32, i32, i32, i32) {
    %c0_i32 = arith.constant 0 : i32
    %c0_i32_0 = arith.constant 0 : i32
    %c0_i32_1 = arith.constant 0 : i32
    return %c0_i32, %arg1, %arg0, %c0_i32_0 : i32, i32, i32, i32
  }
}

</mosaic_0001>

<llo_original>
// kernel: tpu_custom_call.1
$region0: #{tpu_custom_call.1}
  #allocation0 [shape = 'u32[]', space=smem, size = 0x4, offset = 0x4, fixed_abs, tag = 'smem constant byte address 0x4 - core index']
  #allocation1 [shape = 'u32[144,128]{1,0:T(1,128)}', space=vmem, size = 0x12000, scoped, tag = 'internal scratch']
  #allocation2 [shape = 's32[1]{0}', space=sflag, size = 0x4, scoped, tag = 'scoped memory for tpu_custom_call.1']
  #allocation3 [shape = 'u8[512]{0}', space=smem, size = 0x200, scoped, tag = 'prefetched SMEM operand 0']
  %s0 = inlined_call_operand.hbm [shape: s32[12], index: 0, kind: input, shape index: {}]
  %s1 = inlined_call_operand.hbm [shape: f32[2,4,256], index: 1, kind: input, shape index: {}]
  %s2 = inlined_call_operand.hbm [shape: f32[2,3,4,256], index: 2, kind: output, shape index: {}]
  %s3 = sld [smem:[#allocation0]]
  $region41: #{tpu_custom_call.1} parent=0
    _
  %s5 = ssub.s32 1, %s3
  %s6 = scalar_select 0, %s5, %s3
  %8 = dma.hbm_to_smem %s0, 16, [#allocation3], [#allocation2]
  %9 = dma.done [#allocation2], 16
  %10 = sfence
  $region1: #{tpu_custom_call.1} parent=0
    #allocation4 [shape = 'u8[8192]{0}', space=vmem, size = 0x2000, scoped, tag = 'input window, operand 1, single buffered']
    #allocation5 [shape = 's32[2]{0}', space=sflag, size = 0x8, scoped, tag = 'scoped memory for tpu_custom_call.1']
    #allocation6 [shape = 's32[2]{0}', space=sflag, size = 0x8, scoped, tag = 'scoped memory for tpu_custom_call.1']
    #allocation7 [shape = 'u8[16384]{0}', space=vmem, size = 0x4000, scoped, tag = 'output window, operand 0']
    %11 = vsyncpa [#allocation5], 0
    %12 = vsyncpa [#allocation6], 0
    %s13 = scalar_lea.sflag [#allocation6], 1
    %14 = vsyncpa %s13, 0
    loop: start=0, step=1, limit=5
    $region2: #{tpu_custom_call.1} parent=1 // loop_pre_header
      _
    $region3: #{tpu_custom_call.1} parent=1 // loop_header
      %s16 = sphi 0, %s20
      %p17 = scmp.ge.s32.totalorder %s16, 5
      %s23 = sphi 0, %s35
      %s24 = sphi 0, %s31
      %s25 = sphi 0, %s23
      %s26 = sphi 0, %s24
      %s27 = sphi 0, %s25
      %s28 = sphi 0, %s26
      %s38 = sphi 0, %s40
      %s41 = sphi 0, %s38
      %s42 = sphi 0, %s41
      %s58 = sphi 0, %s42
      %s66 = sphi 0, %s68
      %s69 = sphi 0, %s66
      %s70 = sphi 0, %s69
      %s86 = sphi 0, %s70
    $region4: #{tpu_custom_call.1} parent=1 // loop_header_branch
      %19 = sbr.rel (%p17) target = $region8
    $region5: #{tpu_custom_call.1} parent=1 // loop_body
      %s21 = ssub.s32 %s16, 1
      %s22 = ssub.s32 %s16, 2
      %s29 = sadd.s32 1, %s24
      %p30 = scmp.ge.s32.totalorder %s29, 3
      %s31 = scalar_select %p30, 0, %s29
      %s32 = sadd.s32 1, %s23
      %s33 = scalar_select %p30, %s32, %s23
      %p34 = scmp.ge.s32.totalorder %s33, 1
      %s35 = scalar_select %p34, 0, %s33
      %s36 = ssub.s32 %s23, %s35
      %p37 = scmp.eq.s32.totalorder %s36, 0
      %s39 = sadd.s32 %s38, 1
      %s40 = scalar_select %p37, %s38, %s39
      %p43 = pneg %p37
      %p44 = scmp.eq.s32.totalorder %s16, 2
      %p45 = por %p43, %p44
      %p46 = scmp.ne.s32.totalorder %s38, %s41
      %p47 = scmp.eq.s32.totalorder %s16, 0
      %p48 = por %p46, %p47
      %p49 = scmp.ne.s32.totalorder %s38, %s41
      %p50 = scmp.eq.s32.totalorder %s21, 2
      %p51 = por %p49, %p50
      %p52 = scmp.ne.s32.totalorder %s41, %s42
      %p53 = scmp.eq.s32.totalorder %s21, 0
      %p54 = por %p52, %p53
      %p55 = scmp.ne.s32.totalorder %s41, %s42
      %p56 = scmp.eq.s32.totalorder %s22, 2
      %p57 = por %p55, %p56
      %p59 = scmp.ne.s32.totalorder %s42, %s58
      %p60 = scmp.eq.s32.totalorder %s22, 0
      %p61 = por %p59, %p60
      %s62 = ssub.s32 %s24, %s31
      %s63 = ssub.s32 %s23, %s35
      %s64 = sor.u32 %s62, %s63
      %p65 = scmp.eq.s32.totalorder %s64, 0
      %s67 = sadd.s32 %s66, 1
      %s68 = scalar_select %p65, %s66, %s67
      %p71 = pneg %p65
      %p72 = scmp.eq.s32.totalorder %s16, 2
      %p73 = por %p71, %p72
      %p74 = scmp.ne.s32.totalorder %s66, %s69
      %p75 = scmp.eq.s32.totalorder %s16, 0
      %p76 = por %p74, %p75
      %p77 = scmp.ne.s32.totalorder %s66, %s69
      %p78 = scmp.eq.s32.totalorder %s21, 2
      %p79 = por %p77, %p78
      %p80 = scmp.ne.s32.totalorder %s69, %s70
      %p81 = scmp.eq.s32.totalorder %s21, 0
      %p82 = por %p80, %p81
      %p83 = scmp.ne.s32.totalorder %s69, %s70
      %p84 = scmp.eq.s32.totalorder %s22, 2
      %p85 = por %p83, %p84
      %p87 = scmp.ne.s32.totalorder %s70, %s86
      %p88 = scmp.eq.s32.totalorder %s22, 0
      %p89 = por %p87, %p88
      %p90 = scmp.le.s32.totalorder 1, %s16
      %p91 = scmp.lt.s32.totalorder %s16, 4
      %p92 = pnand %p90, %p91
      %p93 = pneg %p92
      // Predicated region
      $region9: #{tpu_custom_call.1} parent=5 // pred_check
        _
      $region10: #{tpu_custom_call.1} parent=5 // pred_check_branch
        %95 = sbr.rel (%p92) target = $region12
      $region11: #{tpu_custom_call.1} parent=5 // pred_region
        %s96 = ssub.s32 %s16, 1
        // Predicated region
        $region13: #{tpu_custom_call.1} parent=11 // pred_check
          %p97 = pneg %p54
        $region14: #{tpu_custom_call.1} parent=11 // pred_check_branch
          %99 = sbr.rel (%p97) target = $region16
        $region15: #{tpu_custom_call.1} parent=11 // pred_region
          %s101 = ssub.s32 256, 256
          %102 = vsyncadd [#allocation5], %s101
          %s103 = smul.addr %s25, 2
          %s104 = smul.addr %s103, 64
          %s105 = scalar_lea.hbm %s1, %s104
          %s106 = sshll.u32 [#allocation4], 4
          %s107 = int_to_ptr.vmem [resolvable:$true] %s106
          %112 = dma.hbm_to_vmem [thread:$0]  %s105, 256, %s107, [#allocation5], 128, 128, 8
        $region16: #{tpu_custom_call.1} parent=11 // pred_fallthru
          _
      $region12: #{tpu_custom_call.1} parent=5 // pred_fallthru
        _
      %p113 = scmp.lt.s32.totalorder %s16, 3
      // Predicated region
      $region17: #{tpu_custom_call.1} parent=5 // pred_check
        %p114 = pneg %p113
      $region18: #{tpu_custom_call.1} parent=5 // pred_check_branch
        %116 = sbr.rel (%p114) target = $region20
      $region19: #{tpu_custom_call.1} parent=5 // pred_region
        _
      $region20: #{tpu_custom_call.1} parent=5 // pred_fallthru
        _
      %p117 = scmp.le.s32.totalorder 1, %s16
      %p118 = scmp.lt.s32.totalorder %s16, 4
      %p119 = pnand %p117, %p118
      %p120 = pneg %p119
      // Predicated region
      $region21: #{tpu_custom_call.1} parent=5 // pred_check
        _
      $region22: #{tpu_custom_call.1} parent=5 // pred_check_branch
        %122 = sbr.rel (%p119) target = $region24
      $region23: #{tpu_custom_call.1} parent=5 // pred_region
        %s123 = ssub.s32 %s16, 1
        // Predicated region
        $region25: #{tpu_custom_call.1} parent=23 // pred_check
          %p124 = pneg %p54
        $region26: #{tpu_custom_call.1} parent=23 // pred_check_branch
          %126 = sbr.rel (%p124) target = $region28
        $region27: #{tpu_custom_call.1} parent=23 // pred_region
          %127 = dma.done [#allocation5], 256
        $region28: #{tpu_custom_call.1} parent=23 // pred_fallthru
          _
        %p128 = pneg %p54
        %p129 = pneg %p51
        %p130 = pneg %p82
        %p131 = pneg %p79
        %s132 = sand.u32 %s69, 1
        %s133 = scalar_lea.sflag [#allocation6], %s132
        %s134 = sand.u32 %s69, 1
        %s135 = smul.addr %s134, 16
        %s136 = scalar_lea.vmem [#allocation7], %s135
        %s137 = smul.u32 %s26, 4
        %s138 = smul.u32 %s25, 4
        %s139 = sadd.s32 %s137, %s138
        %s140 = sld [smem:[#allocation3 + %s139]]
        %v141 = vld [vmem:[#allocation4] ss:$4 sm:$0x3]
        %s142 = scalar_lea.vmem [#allocation4], 8
        %v143 = vld [vmem:[%s142] ss:$4 sm:$0x3]
        %v146 = vcombine.low %v141, %v143
        %v148 = vunpack.c.l.s4 1966171168
        %v149 = vunpack.c.0.s8 %v148
        %v150 = vlaneseq
        %v151 = vshrl.u32 %v150, 7
        %v152 = vsub.s32 %v149, %v151
        %v153 = vrot.slane %v146, %v152
        %v154 = vcombine.high %v153, %v153
        %v156 = vunpack.c.l.s4 1966171168
        %v157 = vunpack.c.0.s8 %v156
        %v158 = vlaneseq
        %v159 = vshrl.u32 %v158, 7
        %v160 = vsub.s32 %v157, %v159
        %v161 = vrot.slane %v153, %v160
        %v163 = vunpack.c.l.s4 1966171168
        %v164 = vunpack.c.0.s8 %v163
        %v165 = vlaneseq
        %v166 = vshrl.u32 %v165, 7
        %v167 = vsub.s32 %v164, %v166
        %v168 = vrot.slane %v154, %v167
        %s171 = sand.u32 %s140, 255
        %s172 = sand.u32 %s171, 127
        %s173 = sshrl.u32 %s171, 7
        %174 = vrot.lane.b32.xlu0 %v161, %s172
        %v175 = vpop.permute.xlu0 %174
        %176 = vrot.lane.b32.xlu0 %v168, %s172
        %v177 = vpop.permute.xlu0 %176
        %v178 = vstv %s172
        %v179 = vlaneseq
        %v180 = vand.u32 %v179, 127
        %vm181 = vcmp.lt.s32.totalorder %v180, %v178
        %v182 = vsel %vm181, %v175, %v177
        %v183 = vsel %vm181, %v177, %v175
        %s184 = sand.u32 %s173, 1
        %v185 = vstv %s184
        %vm186 = vcmp.ne.s32.totalorder %v185, 0
        %v187 = vsel %vm186, %v182, %v183
        %v188 = vsel %vm186, %v183, %v182
        %v191 = vcombine.low %v187, %v188
        %v193 = vunpack.c.l.s4 1966171168
        %v194 = vunpack.c.0.s8 %v193
        %v195 = vlaneseq
        %v196 = vshrl.u32 %v195, 7
        %v197 = vsub.s32 %v194, %v196
        %v198 = vrot.slane %v191, %v197
        %v199 = vcombine.high %v198, %v198
        %v201 = vunpack.c.l.s4 1966171168
        %v202 = vunpack.c.0.s8 %v201
        %v203 = vlaneseq
        %v204 = vshrl.u32 %v203, 7
        %v205 = vsub.s32 %v202, %v204
        %v206 = vrot.slane %v198, %v205
        %v208 = vunpack.c.l.s4 1966171168
        %v209 = vunpack.c.0.s8 %v208
        %v210 = vlaneseq
        %v211 = vshrl.u32 %v210, 7
        %v212 = vsub.s32 %v209, %v211
        %v213 = vrot.slane %v199, %v212
        %v216 = vlaneseq
        %vm217 = vcmp.ge.s32.totalorder %v216, 0
        %vm218 = vcmp.lt.s32.totalorder %v216, 256
        %vm219 = vmand %vm217, %vm218
        %220 = vst.msk [vmem:[%s136] ss:$4 sm:$0x3] %vm219, %v206
        %s221 = scalar_lea.vmem %s136, 8 [#allocation7]
        %222 = vst.msk [vmem:[%s221] ss:$4 sm:$0x3] %vm219, %v213
        %s223 = sadd.s32 %s139, 1
        %s224 = sld [smem:[#allocation3 + %s223]]
        %s225 = scalar_lea.vmem [#allocation4], 1
        %v226 = vld [vmem:[%s225] ss:$4 sm:$0x3]
        %s227 = scalar_lea.vmem [#allocation4], 9
        %v228 = vld [vmem:[%s227] ss:$4 sm:$0x3]
        %v231 = vcombine.low %v226, %v228
        %v233 = vunpack.c.l.s4 1966171168
        %v234 = vunpack.c.0.s8 %v233
        %v235 = vlaneseq
        %v236 = vshrl.u32 %v235, 7
        %v237 = vsub.s32 %v234, %v236
        %v238 = vrot.slane %v231, %v237
        %v239 = vcombine.high %v238, %v238
        %v241 = vunpack.c.l.s4 1966171168
        %v242 = vunpack.c.0.s8 %v241
        %v243 = vlaneseq
        %v244 = vshrl.u32 %v243, 7
        %v245 = vsub.s32 %v242, %v244
        %v246 = vrot.slane %v238, %v245
        %v248 = vunpack.c.l.s4 1966171168
        %v249 = vunpack.c.0.s8 %v248
        %v250 = vlaneseq
        %v251 = vshrl.u32 %v250, 7
        %v252 = vsub.s32 %v249, %v251
        %v253 = vrot.slane %v239, %v252
        %s256 = sand.u32 %s224, 255
        %s257 = sand.u32 %s256, 127
        %s258 = sshrl.u32 %s256, 7
        %259 = vrot.lane.b32.xlu0 %v246, %s257
        %v260 = vpop.permute.xlu0 %259
        %261 = vrot.lane.b32.xlu0 %v253, %s257
        %v262 = vpop.permute.xlu0 %261
        %v263 = vstv %s257
        %vm264 = vcmp.lt.s32.totalorder %v180, %v263
        %v265 = vsel %vm264, %v260, %v262
        %v266 = vsel %vm264, %v262, %v260
        %s267 = sand.u32 %s258, 1
        %v268 = vstv %s267
        %vm269 = vcmp.ne.s32.totalorder %v268, 0
        %v270 = vsel %vm269, %v265, %v266
        %v271 = vsel %vm269, %v266, %v265
        %v274 = vcombine.low %v270, %v271
        %v276 = vunpack.c.l.s4 1966171168
        %v277 = vunpack.c.0.s8 %v276
        %v278 = vlaneseq
        %v279 = vshrl.u32 %v278, 7
        %v280 = vsub.s32 %v277, %v279
        %v281 = vrot.slane %v274, %v280
        %v282 = vcombine.high %v281, %v281
        %v284 = vunpack.c.l.s4 1966171168
        %v285 = vunpack.c.0.s8 %v284
        %v286 = vlaneseq
        %v287 = vshrl.u32 %v286, 7
        %v288 = vsub.s32 %v285, %v287
        %v289 = vrot.slane %v281, %v288
        %v291 = vunpack.c.l.s4 1966171168
        %v292 = vunpack.c.0.s8 %v291
        %v293 = vlaneseq
        %v294 = vshrl.u32 %v293, 7
        %v295 = vsub.s32 %v292, %v294
        %v296 = vrot.slane %v282, %v295
        %s299 = scalar_lea.vmem %s136, 1 [#allocation7]
        %300 = vst.msk [vmem:[%s299] ss:$4 sm:$0x3] %vm219, %v289
        %s301 = scalar_lea.vmem %s136, 9 [#allocation7]
        %302 = vst.msk [vmem:[%s301] ss:$4 sm:$0x3] %vm219, %v296
        %s303 = sadd.s32 %s139, 2
        %s304 = sld [smem:[#allocation3 + %s303]]
        %s305 = scalar_lea.vmem [#allocation4], 2
        %v306 = vld [vmem:[%s305] ss:$4 sm:$0x3]
        %s307 = scalar_lea.vmem [#allocation4], 10
        %v308 = vld [vmem:[%s307] ss:$4 sm:$0x3]
        %v311 = vcombine.low %v306, %v308
        %v313 = vunpack.c.l.s4 1966171168
        %v314 = vunpack.c.0.s8 %v313
        %v315 = vlaneseq
        %v316 = vshrl.u32 %v315, 7
        %v317 = vsub.s32 %v314, %v316
        %v318 = vrot.slane %v311, %v317
        %v319 = vcombine.high %v318, %v318
        %v321 = vunpack.c.l.s4 1966171168
        %v322 = vunpack.c.0.s8 %v321
        %v323 = vlaneseq
        %v324 = vshrl.u32 %v323, 7
        %v325 = vsub.s32 %v322, %v324
        %v326 = vrot.slane %v318, %v325
        %v328 = vunpack.c.l.s4 1966171168
        %v329 = vunpack.c.0.s8 %v328
        %v330 = vlaneseq
        %v331 = vshrl.u32 %v330, 7
        %v332 = vsub.s32 %v329, %v331
        %v333 = vrot.slane %v319, %v332
        %s336 = sand.u32 %s304, 255
        %s337 = sand.u32 %s336, 127
        %s338 = sshrl.u32 %s336, 7
        %339 = vrot.lane.b32.xlu0 %v326, %s337
        %v340 = vpop.permute.xlu0 %339
        %341 = vrot.lane.b32.xlu0 %v333, %s337
        %v342 = vpop.permute.xlu0 %341
        %v343 = vstv %s337
        %vm344 = vcmp.lt.s32.totalorder %v180, %v343
        %v345 = vsel %vm344, %v340, %v342
        %v346 = vsel %vm344, %v342, %v340
        %s347 = sand.u32 %s338, 1
        %v348 = vstv %s347
        %vm349 = vcmp.ne.s32.totalorder %v348, 0
        %v350 = vsel %vm349, %v345, %v346
        %v351 = vsel %vm349, %v346, %v345
        %v354 = vcombine.low %v350, %v351
        %v356 = vunpack.c.l.s4 1966171168
        %v357 = vunpack.c.0.s8 %v356
        %v358 = vlaneseq
        %v359 = vshrl.u32 %v358, 7
        %v360 = vsub.s32 %v357, %v359
        %v361 = vrot.slane %v354, %v360
        %v362 = vcombine.high %v361, %v361
        %v364 = vunpack.c.l.s4 1966171168
        %v365 = vunpack.c.0.s8 %v364
        %v366 = vlaneseq
        %v367 = vshrl.u32 %v366, 7
        %v368 = vsub.s32 %v365, %v367
        %v369 = vrot.slane %v361, %v368
        %v371 = vunpack.c.l.s4 1966171168
        %v372 = vunpack.c.0.s8 %v371
        %v373 = vlaneseq
        %v374 = vshrl.u32 %v373, 7
        %v375 = vsub.s32 %v372, %v374
        %v376 = vrot.slane %v362, %v375
        %s379 = scalar_lea.vmem %s136, 2 [#allocation7]
        %380 = vst.msk [vmem:[%s379] ss:$4 sm:$0x3] %vm219, %v369
        %s381 = scalar_lea.vmem %s136, 10 [#allocation7]
        %382 = vst.msk [vmem:[%s381] ss:$4 sm:$0x3] %vm219, %v376
        %s383 = sadd.s32 %s139, 3
        %s384 = sld [smem:[#allocation3 + %s383]]
        %s385 = scalar_lea.vmem [#allocation4], 3
        %v386 = vld [vmem:[%s385] ss:$4 sm:$0x3]
        %s387 = scalar_lea.vmem [#allocation4], 11
        %v388 = vld [vmem:[%s387] ss:$4 sm:$0x3]
        %v391 = vcombine.low %v386, %v388
        %v393 = vunpack.c.l.s4 1966171168
        %v394 = vunpack.c.0.s8 %v393
        %v395 = vlaneseq
        %v396 = vshrl.u32 %v395, 7
        %v397 = vsub.s32 %v394, %v396
        %v398 = vrot.slane %v391, %v397
        %v399 = vcombine.high %v398, %v398
        %v401 = vunpack.c.l.s4 1966171168
        %v402 = vunpack.c.0.s8 %v401
        %v403 = vlaneseq
        %v404 = vshrl.u32 %v403, 7
        %v405 = vsub.s32 %v402, %v404
        %v406 = vrot.slane %v398, %v405
        %v408 = vunpack.c.l.s4 1966171168
        %v409 = vunpack.c.0.s8 %v408
        %v410 = vlaneseq
        %v411 = vshrl.u32 %v410, 7
        %v412 = vsub.s32 %v409, %v411
        %v413 = vrot.slane %v399, %v412
        %s416 = sand.u32 %s384, 255
        %s417 = sand.u32 %s416, 127
        %s418 = sshrl.u32 %s416, 7
        %419 = vrot.lane.b32.xlu0 %v406, %s417
        %v420 = vpop.permute.xlu0 %419
        %421 = vrot.lane.b32.xlu0 %v413, %s417
        %v422 = vpop.permute.xlu0 %421
        %v423 = vstv %s417
        %vm424 = vcmp.lt.s32.totalorder %v180, %v423
        %v425 = vsel %vm424, %v420, %v422
        %v426 = vsel %vm424, %v422, %v420
        %s427 = sand.u32 %s418, 1
        %v428 = vstv %s427
        %vm429 = vcmp.ne.s32.totalorder %v428, 0
        %v430 = vsel %vm429, %v425, %v426
        %v431 = vsel %vm429, %v426, %v425
        %v434 = vcombine.low %v430, %v431
        %v436 = vunpack.c.l.s4 1966171168
        %v437 = vunpack.c.0.s8 %v436
        %v438 = vlaneseq
        %v439 = vshrl.u32 %v438, 7
        %v440 = vsub.s32 %v437, %v439
        %v441 = vrot.slane %v434, %v440
        %v442 = vcombine.high %v441, %v441
        %v444 = vunpack.c.l.s4 1966171168
        %v445 = vunpack.c.0.s8 %v444
        %v446 = vlaneseq
        %v447 = vshrl.u32 %v446, 7
        %v448 = vsub.s32 %v445, %v447
        %v449 = vrot.slane %v441, %v448
        %v451 = vunpack.c.l.s4 1966171168
        %v452 = vunpack.c.0.s8 %v451
        %v453 = vlaneseq
        %v454 = vshrl.u32 %v453, 7
        %v455 = vsub.s32 %v452, %v454
        %v456 = vrot.slane %v442, %v455
        %s459 = scalar_lea.vmem %s136, 3 [#allocation7]
        %460 = vst.msk [vmem:[%s459] ss:$4 sm:$0x3] %vm219, %v449
        %s461 = scalar_lea.vmem %s136, 11 [#allocation7]
        %462 = vst.msk [vmem:[%s461] ss:$4 sm:$0x3] %vm219, %v456
        %s463 = sand.u32 %s69, 1
        %s464 = scalar_lea.sflag [#allocation6], %s463
        %s465 = sand.u32 %s69, 1
        %s466 = smul.addr %s465, 16
        %s467 = scalar_lea.vmem [#allocation7], %s466
        // Predicated region
        $region29: #{tpu_custom_call.1} parent=23 // pred_check
          %p468 = pneg %p79
        $region30: #{tpu_custom_call.1} parent=23 // pred_check_branch
          %470 = sbr.rel (%p468) target = $region32
        $region31: #{tpu_custom_call.1} parent=23 // pred_region
          %s472 = ssub.s32 256, 256
          %473 = vsyncadd %s464, %s472
          %s474 = smul.addr %s25, 2
          %s475 = smul.addr %s26, 2
          %s476 = sadd.s32 %s474, %s475
          %s477 = smul.addr %s476, 64
          %s478 = scalar_lea.hbm %s2, %s477
          %s479 = sshll.u32 %s467, 4
          %s480 = int_to_ptr.vmem [resolvable:$true] %s479
          %485 = dma.vmem_to_hbm [thread:$0]  %s480, 256, %s478, %s464, 128, 384, 8
        $region32: #{tpu_custom_call.1} parent=23 // pred_fallthru
          _
      $region24: #{tpu_custom_call.1} parent=5 // pred_fallthru
        _
      %p486 = scmp.le.s32.totalorder 2, %s16
      // Predicated region
      $region33: #{tpu_custom_call.1} parent=5 // pred_check
        %p487 = pneg %p486
      $region34: #{tpu_custom_call.1} parent=5 // pred_check_branch
        %489 = sbr.rel (%p487) target = $region36
      $region35: #{tpu_custom_call.1} parent=5 // pred_region
        %s490 = ssub.s32 %s16, 2
        // Predicated region
        $region37: #{tpu_custom_call.1} parent=35 // pred_check
          %p491 = pneg %p85
        $region38: #{tpu_custom_call.1} parent=35 // pred_check_branch
          %493 = sbr.rel (%p491) target = $region40
        $region39: #{tpu_custom_call.1} parent=35 // pred_region
          %s494 = sand.u32 %s70, 1
          %s495 = scalar_lea.sflag [#allocation6], %s494
          %s496 = sand.u32 %s70, 1
          %s497 = smul.addr %s496, 16
          %s498 = scalar_lea.vmem [#allocation7], %s497
          %499 = dma.done %s495, 256
        $region40: #{tpu_custom_call.1} parent=35 // pred_fallthru
          _
      $region36: #{tpu_custom_call.1} parent=5 // pred_fallthru
        _
    $region6: #{tpu_custom_call.1} parent=1 // loop_footer
      %s20 = sadd.s32 1, %s16
    $region7: #{tpu_custom_call.1} parent=1 // loop_footer_branch
      %15 = sbr.rel target = $region3
    $region8: #{tpu_custom_call.1} parent=1 // loop_exit
      _
    %500 = vsyncpa [#allocation5], 1
    %s501 = scalar_lea.sflag [#allocation5], 1
    %502 = vsyncpa %s501, 1
    %503 = vsyncpa [#allocation6], 1
    %s504 = scalar_lea.sflag [#allocation6], 1
    %505 = vsyncpa %s504, 1

</llo_original>
